<compile_context>
chip_gen: v6e
topology: v6e:2x2x1
jax: 0.10.0
libtpu: 0.0.40
codegen_flags: <defaults>
</compile_context>

<pallas_src>
import functools
import math

import jax
import jax.numpy as jnp
from jax.experimental import pallas as pl
from jax.experimental.pallas import tpu as pltpu

LANES = 128
DEFAULT_BLOCK_ROWS = 4096  # 4096 x 128 x 4B = 2 MiB per f32 input tile


def _mse_kernel(pred_ref, tgt_ref, out_ref, acc_ref, *, scale, block_rows,
                rows_valid, mask_rows, blocks_per_split):
    j = pl.program_id(1)

    @pl.when(j == 0)
    def _():
        acc_ref[...] = jnp.zeros_like(acc_ref)

    p = pred_ref[...].astype(jnp.float32)
    t = tgt_ref[...].astype(jnp.float32)
    diff = p - scale * t
    sq = diff * diff

    if mask_rows:
        # Only the final (partial) tile has out-of-range rows; the mask is a
        # VPU compare+select, hidden under the DMA in this mem-bound kernel.
        s = pl.program_id(0)
        row0 = (s * blocks_per_split + j) * block_rows
        row_idx = row0 + jax.lax.broadcasted_iota(jnp.int32, sq.shape, 0)
        sq = jnp.where(row_idx < rows_valid, sq, 0.0)

    if block_rows % 8 == 0:
        # Pure VPU in steady state: vreg-group-wise adds into an (8,128) partial.
        acc_ref[...] += sq.reshape(block_rows // 8, 8, LANES).sum(axis=0)
    else:
        # Tiny single-block inputs only (block_rows == rows, not 8-aligned).
        acc_ref[0:1, :] = acc_ref[0:1, :] + jnp.sum(sq, axis=0, keepdims=True)

    @pl.when(j == pl.num_programs(1) - 1)
    def _():
        out_ref[...] = acc_ref[...]


def magnified_mse_loss(pred, target, magnitude_scale, *,
                       block_rows=DEFAULT_BLOCK_ROWS):
    assert pred.shape == target.shape
    n_valid = math.prod(pred.shape)

    pred_f = pred.reshape(-1)
    tgt_f = target.reshape(-1)

    # Lane padding only in the rare case numel % 128 != 0 (padded zeros
    # contribute 0 to the sum of squares, and the mean divides by n_valid).
    lane_pad = (-n_valid) % LANES
    if lane_pad:
        # TODO(synk): this tail pad costs one extra HBM copy; a dedicated 1-D
        # tail kernel could remove it, but it only triggers when numel % 128.
        pred_f = jnp.pad(pred_f, (0, lane_pad))
        tgt_f = jnp.pad(tgt_f, (0, lane_pad))

    rows = pred_f.shape[0] // LANES
    pred2d = pred_f.reshape(rows, LANES)
    tgt2d = tgt_f.reshape(rows, LANES)

    if rows <= block_rows:
        block_rows = rows  # full-extent block: always layout-legal
    num_blocks = -(-rows // block_rows)
    mask_rows = (rows % block_rows) != 0

    # v7x: shard the streaming reduction across the 2 TensorCores when the
    # block count splits evenly; single-TC chips (v5e/v6e) just serialize the
    # leading grid axis at negligible cost.
    num_splits = 2 if (num_blocks >= 2 and num_blocks % 2 == 0) else 1
    blocks_per_split = num_blocks // num_splits

    kernel = functools.partial(
        _mse_kernel,
        scale=float(magnitude_scale),
        block_rows=block_rows,
        rows_valid=rows,
        mask_rows=mask_rows,
        blocks_per_split=blocks_per_split,
    )

    in_spec = pl.BlockSpec((block_rows, LANES),
                           lambda s, j: (s * blocks_per_split + j, 0))

    partials = pl.pallas_call(
        kernel,
        out_shape=jax.ShapeDtypeStruct((num_splits * 8, LANES), jnp.float32),
        grid_spec=pltpu.PrefetchScalarGridSpec(
            num_scalar_prefetch=0,
            grid=(num_splits, blocks_per_split),
            in_specs=[in_spec, in_spec],
            out_specs=pl.BlockSpec((8, LANES), lambda s, j: (s, 0)),
            scratch_shapes=[pltpu.VMEM((8, LANES), jnp.float32)],
        ),
        compiler_params=pltpu.CompilerParams(
            dimension_semantics=("parallel", "arbitrary"),
        ),
    )(pred2d, tgt2d)

    # Single tiny cross-lane reduce + mean, outside the hot loop.
    return jnp.sum(partials) * (1.0 / float(n_valid))


if __name__ == "__main__":
    key = jax.random.PRNGKey(0)
    k1, k2, k3, k4 = jax.random.split(key, 4)

    magnitude_scale = 10.0

    # Small NCHW tensors (single-tile path), consistent with a pred/target pair.
    pred = jax.random.normal(k1, (2, 4, 16, 16), dtype=jnp.float32)
    target = jax.random.normal(k2, (2, 4, 16, 16), dtype=jnp.float32)
    loss = magnified_mse_loss(pred, target, magnitude_scale)
    jax.block_until_ready(loss)
    ref = jnp.mean((pred - target * magnitude_scale) ** 2)
    assert jnp.allclose(loss, ref, rtol=1e-4, atol=1e-5), (loss, ref)

    # Larger case exercising multi-tile streaming, last-tile row masking, and
    # the 2-way TensorCore split (rows = 8320 -> 2 blocks of 4096 + partial).
    pred_b = jax.random.normal(k3, (4, 8, 260, 128), dtype=jnp.float32)
    target_b = jax.random.normal(k4, (4, 8, 260, 128), dtype=jnp.float32)
    loss_b = magnified_mse_loss(pred_b, target_b, magnitude_scale)
    jax.block_until_ready(loss_b)
    ref_b = jnp.mean((pred_b - target_b * magnitude_scale) ** 2)
    assert jnp.allclose(loss_b, ref_b, rtol=1e-4, atol=1e-5), (loss_b, ref_b)

    # bf16 inputs: kernel casts per-tile, inputs stream at bf16 bytes.
    pred_c = jax.random.normal(k3, (2, 4, 33, 16), dtype=jnp.bfloat16)
    target_c = jax.random.normal(k4, (2, 4, 33, 16), dtype=jnp.bfloat16)
    loss_c = magnified_mse_loss(pred_c, target_c, magnitude_scale)
    jax.block_until_ready(loss_c)
    ref_c = jnp.mean(
        (pred_c.astype(jnp.float32)
         - target_c.astype(jnp.float32) * magnitude_scale) ** 2)
    assert jnp.allclose(loss_c, ref_c, rtol=1e-2, atol=1e-3), (loss_c, ref_c)

    print("KERNEL_OK")
</pallas_src>

<mosaic_0001>
module attributes {stable_mosaic.version = 11 : i64} {
  func.func @_mse_kernel(%arg0: i32, %arg1: i32, %arg2: memref<16x128xf32, #tpu.memory_space<vmem>>, %arg3: memref<16x128xf32, #tpu.memory_space<vmem>>, %arg4: memref<8x128xf32, #tpu.memory_space<vmem>>, %arg5: memref<8x128xf32, #tpu.memory_space<vmem>>) attributes {dimension_semantics = [#tpu.dimension_semantics<parallel>, #tpu.dimension_semantics<arbitrary>], iteration_bounds = array<i64: 1, 1>, scalar_prefetch = 0 : i64, scratch_operands = 1 : i64, tpu.core_type = #tpu.core_type<tc>, window_params = [{transform_indices = @transform_0, window_bounds = array<i64: 16, 128>}, {transform_indices = @transform_1, window_bounds = array<i64: 16, 128>}, {transform_indices = @transform_2, window_bounds = array<i64: 8, 128>}]} {
    %c0_i32 = arith.constant 0 : i32
    %0 = arith.cmpi eq, %arg1, %c0_i32 : i32
    %1 = arith.extui %0 : i1 to i32
    %c0_i32_0 = arith.constant 0 : i32
    %2 = arith.cmpi ne, %1, %c0_i32_0 : i32
    scf.if %2 {
      %cst_11 = arith.constant 0.000000e+00 : f32
      %17 = vector.broadcast %cst_11 : f32 to vector<8x128xf32>
      %c0_12 = arith.constant 0 : index
      %c0_13 = arith.constant 0 : index
      %18 = vector.load %arg5[%c0_12, %c0_13] : memref<8x128xf32, #tpu.memory_space<vmem>>, vector<8x128xf32>
      tpu.vector_store %arg5[%c0_12, %c0_13], %17 {strides = array<i32>} : memref<8x128xf32, #tpu.memory_space<vmem>>, vector<8x128xf32>,
    } else {
    }
    %c0 = arith.constant 0 : index
    %c0_1 = arith.constant 0 : index
    %3 = vector.load %arg2[%c0, %c0_1] : memref<16x128xf32, #tpu.memory_space<vmem>>, vector<16x128xf32>
    %c0_2 = arith.constant 0 : index
    %c0_3 = arith.constant 0 : index
    %4 = vector.load %arg3[%c0_2, %c0_3] : memref<16x128xf32, #tpu.memory_space<vmem>>, vector<16x128xf32>
    %cst = arith.constant 1.000000e+01 : f32
    %5 = vector.broadcast %cst : f32 to vector<16x128xf32>
    %6 = arith.mulf %5, %4 : vector<16x128xf32>
    %7 = arith.subf %3, %6 : vector<16x128xf32>
    %8 = arith.mulf %7, %7 : vector<16x128xf32>
    %c0_4 = arith.constant 0 : index
    %c0_5 = arith.constant 0 : index
    %9 = vector.load %arg5[%c0_4, %c0_5] : memref<8x128xf32, #tpu.memory_space<vmem>>, vector<8x128xf32>
    %10 = vector.shape_cast %8 : vector<16x128xf32> to vector<2x8x128xf32>
    %cst_6 = arith.constant dense<0.000000e+00> : vector<8x128xf32>
    %11 = vector.multi_reduction <add>, %10, %cst_6 [0] : vector<2x8x128xf32> to vector<8x128xf32>
    %12 = arith.addf %9, %11 : vector<8x128xf32>
    %c0_7 = arith.constant 0 : index
    %c0_8 = arith.constant 0 : index
    %13 = vector.load %arg5[%c0_7, %c0_8] : memref<8x128xf32, #tpu.memory_space<vmem>>, vector<8x128xf32>
    tpu.vector_store %arg5[%c0_7, %c0_8], %12 {strides = array<i32>} : memref<8x128xf32, #tpu.memory_space<vmem>>, vector<8x128xf32>,
    %c0_i32_9 = arith.constant 0 : i32
    %14 = arith.cmpi eq, %arg1, %c0_i32_9 : i32
    %15 = arith.extui %14 : i1 to i32
    %c0_i32_10 = arith.constant 0 : i32
    %16 = arith.cmpi ne, %15, %c0_i32_10 : i32
    scf.if %16 {
      %c0_11 = arith.constant 0 : index
      %c0_12 = arith.constant 0 : index
      %17 = vector.load %arg5[%c0_11, %c0_12] : memref<8x128xf32, #tpu.memory_space<vmem>>, vector<8x128xf32>
      %c0_13 = arith.constant 0 : index
      %c0_14 = arith.constant 0 : index
      %18 = vector.load %arg4[%c0_13, %c0_14] : memref<8x128xf32, #tpu.memory_space<vmem>>, vector<8x128xf32>
      tpu.vector_store %arg4[%c0_13, %c0_14], %17 {strides = array<i32>} : memref<8x128xf32, #tpu.memory_space<vmem>>, vector<8x128xf32>,
    } else {
    }
    return
  }
  func.func @transform_0(%arg0: i32, %arg1: i32) -> (i32, i32) {
    %c1_i32 = arith.constant 1 : i32
    %0 = arith.muli %arg0, %c1_i32 : i32
    %1 = arith.addi %0, %arg1 : i32
    %c0_i32 = arith.constant 0 : i32
    %c0_i32_0 = arith.constant 0 : i32
    return %1, %c0_i32 : i32, i32
  }
  func.func @transform_1(%arg0: i32, %arg1: i32) -> (i32, i32) {
    %c1_i32 = arith.constant 1 : i32
    %0 = arith.muli %arg0, %c1_i32 : i32
    %1 = arith.addi %0, %arg1 : i32
    %c0_i32 = arith.constant 0 : i32
    %c0_i32_0 = arith.constant 0 : i32
    return %1, %c0_i32 : i32, i32
  }
  func.func @transform_2(%arg0: i32, %arg1: i32) -> (i32, i32) {
    %c0_i32 = arith.constant 0 : i32
    %c0_i32_0 = arith.constant 0 : i32
    return %arg0, %c0_i32 : i32, i32
  }
}

</mosaic_0001>

<llo_original>
// kernel: tpu_custom_call.1
$region0: #{tpu_custom_call.1}
  #allocation0 [shape = 'u32[]', space=smem, size = 0x4, offset = 0x4, fixed_abs, tag = 'smem constant byte address 0x4 - core index']
  #allocation1 [shape = 'u32[144,128]{1,0:T(1,128)}', space=vmem, size = 0x12000, scoped, tag = 'internal scratch']
  #allocation2 [shape = 'f32[8,128]{1,0:T(8,128)}', space=vmem, size = 0x1000, scoped, tag = 'scratch operand']
  %s0 = inlined_call_operand.hbm [shape: f32[16,128], index: 0, kind: input, shape index: {}]
  %s1 = inlined_call_operand.hbm [shape: f32[16,128], index: 1, kind: input, shape index: {}]
  %s2 = inlined_call_operand.hbm [shape: f32[8,128], index: 2, kind: output, shape index: {}]
  %s3 = sld [smem:[#allocation0]]
  $region34: #{tpu_custom_call.1} parent=0
    _
  %s5 = ssub.s32 1, %s3
  %s6 = scalar_select 0, %s5, %s3
  $region1: #{tpu_custom_call.1} parent=0
    #allocation3 [shape = 'u8[8192]{0}', space=vmem, size = 0x2000, scoped, tag = 'input window, operand 0, single buffered']
    #allocation4 [shape = 's32[1]{0}', space=sflag, size = 0x4, scoped, tag = 'scoped memory for tpu_custom_call.1']
    #allocation5 [shape = 's32[1]{0}', space=sflag, size = 0x4, scoped, tag = 'scoped memory for tpu_custom_call.1']
    #allocation6 [shape = 'u8[8192]{0}', space=vmem, size = 0x2000, scoped, tag = 'input window, operand 1, single buffered']
    #allocation7 [shape = 's32[1]{0}', space=sflag, size = 0x4, scoped, tag = 'scoped memory for tpu_custom_call.1']
    #allocation8 [shape = 'u8[4096]{0}', space=vmem, size = 0x1000, scoped, tag = 'output window, operand 0, single buffered']
    %7 = vsyncpa [#allocation4], 0
    %8 = vsyncpa [#allocation7], 0
    %9 = vsyncpa [#allocation5], 0
    // Predicated region
    $region2: #{tpu_custom_call.1} parent=1 // pred_check
      _
    $region3: #{tpu_custom_call.1} parent=1 // pred_check_branch
      %11 = sbr.rel (0) target = $region5
    $region4: #{tpu_custom_call.1} parent=1 // pred_region
      %s12 = sadd.s32 0, 0
      %s13 = smul.u32 2, %s12
      %s15 = ssub.s32 256, 256
      %16 = vsyncadd [#allocation4], %s15
      %s17 = smul.addr %s13, 128
      %s18 = scalar_lea.hbm %s0, %s17
      %s19 = sshll.u32 [#allocation3], 4
      %s20 = int_to_ptr.vmem [resolvable:$true] %s19
      %25 = dma.hbm_to_vmem [thread:$0]  %s18, 256, %s20, [#allocation4], 128, 128, 8
    $region5: #{tpu_custom_call.1} parent=1 // pred_fallthru
      _
    // Predicated region
    $region6: #{tpu_custom_call.1} parent=1 // pred_check
      _
    $region7: #{tpu_custom_call.1} parent=1 // pred_check_branch
      %27 = sbr.rel (0) target = $region9
    $region8: #{tpu_custom_call.1} parent=1 // pred_region
      %s28 = sadd.s32 0, 0
      %s29 = smul.u32 2, %s28
      %s31 = ssub.s32 256, 256
      %32 = vsyncadd [#allocation7], %s31
      %s33 = smul.addr %s29, 128
      %s34 = scalar_lea.hbm %s1, %s33
      %s35 = sshll.u32 [#allocation6], 4
      %s36 = int_to_ptr.vmem [resolvable:$true] %s35
      %41 = dma.hbm_to_vmem [thread:$0]  %s34, 256, %s36, [#allocation7], 128, 128, 8
    $region9: #{tpu_custom_call.1} parent=1 // pred_fallthru
      _
    // Predicated region
    $region10: #{tpu_custom_call.1} parent=1 // pred_check
      _
    $region11: #{tpu_custom_call.1} parent=1 // pred_check_branch
      %43 = sbr.rel (0) target = $region13
    $region12: #{tpu_custom_call.1} parent=1 // pred_region
      %44 = dma.done [#allocation4], 256
    $region13: #{tpu_custom_call.1} parent=1 // pred_fallthru
      _
    // Predicated region
    $region14: #{tpu_custom_call.1} parent=1 // pred_check
      _
    $region15: #{tpu_custom_call.1} parent=1 // pred_check_branch
      %46 = sbr.rel (0) target = $region17
    $region16: #{tpu_custom_call.1} parent=1 // pred_region
      %47 = dma.done [#allocation7], 256
    $region17: #{tpu_custom_call.1} parent=1 // pred_fallthru
      _
    %s48 = sadd.s32 0, 0
    %s49 = smul.u32 2, %s48
    %s50 = sadd.s32 0, 0
    %s51 = smul.u32 2, %s50
    %p52 = scmp.eq.s32.totalorder 0, 0
    // Predicated region
    $region18: #{tpu_custom_call.1} parent=1 // pred_check
      %p53 = pneg %p52
    $region19: #{tpu_custom_call.1} parent=1 // pred_check_branch
      %55 = sbr.rel (%p53) target = $region21
    $region20: #{tpu_custom_call.1} parent=1 // pred_region
      %56 = vst [vmem:[#allocation2] sm:$0xff] 0.0
    $region21: #{tpu_custom_call.1} parent=1 // pred_fallthru
      _
    %v57 = vld [vmem:[#allocation3] sm:$0xff]
    %v58 = vld [vmem:[#allocation3 + $0x8] sm:$0xff]
    %v59 = vld [vmem:[#allocation6] sm:$0xff]
    %v60 = vld [vmem:[#allocation6 + $0x8] sm:$0xff]
    %v61 = vmul.f32 %v59, 10.0
    %v62 = vmul.f32 %v60, 10.0
    %v63 = vsub.f32 %v57, %v61
    %v64 = vsub.f32 %v58, %v62
    %v65 = vmul.f32 %v63, %v63
    %v66 = vmul.f32 %v64, %v64
    %v67 = vld [vmem:[#allocation2] sm:$0xff]
    %v68 = vadd.f32 %v65, %v66
    %v69 = vadd.f32 %v67, %v68
    %70 = vst [vmem:[#allocation2] sm:$0xff] %v69
    // Predicated region
    $region22: #{tpu_custom_call.1} parent=1 // pred_check
      %p71 = pneg %p52
    $region23: #{tpu_custom_call.1} parent=1 // pred_check_branch
      %73 = sbr.rel (%p71) target = $region25
    $region24: #{tpu_custom_call.1} parent=1 // pred_region
      %v74 = vld [vmem:[#allocation2] sm:$0xff]
      %75 = vst [vmem:[#allocation8] sm:$0xff] %v74
    $region25: #{tpu_custom_call.1} parent=1 // pred_fallthru
      _
    // Predicated region
    $region26: #{tpu_custom_call.1} parent=1 // pred_check
      _
    $region27: #{tpu_custom_call.1} parent=1 // pred_check_branch
      %77 = sbr.rel (0) target = $region29
    $region28: #{tpu_custom_call.1} parent=1 // pred_region
      %s79 = ssub.s32 128, 128
      %80 = vsyncadd [#allocation5], %s79
      %s82 = sshll.u32 [#allocation8], 4
      %s83 = int_to_ptr.vmem [resolvable:$true] %s82
      %85 = dma.vmem_to_hbm [thread:$0]  %s83, 128, %s2, [#allocation5]
    $region29: #{tpu_custom_call.1} parent=1 // pred_fallthru
      _
    // Predicated region
    $region30: #{tpu_custom_call.1} parent=1 // pred_check
      _
    $region31: #{tpu_custom_call.1} parent=1 // pred_check_branch
      %87 = sbr.rel (0) target = $region33
    $region32: #{tpu_custom_call.1} parent=1 // pred_region
      %88 = dma.done [#allocation5], 128
    $region33: #{tpu_custom_call.1} parent=1 // pred_fallthru
      _
    %89 = vsyncpa [#allocation4], 1
    %90 = vsyncpa [#allocation7], 1
    %91 = vsyncpa [#allocation5], 1

</llo_original>
